<compile_context>
chip_gen: v5e
topology: v5e:2x2
jax: 0.10.0
libtpu: 0.0.40
codegen_flags: <defaults>
</compile_context>

<pallas_src>
import jax
import jax.numpy as jnp
from jax import lax
from jax.experimental import pallas as pl
from jax.experimental.pallas import tpu as pltpu


# ------------------------- Pallas kernel -------------------------

def _bbox_head_kernel(x_ref, w_ref, b_ref, o_ref):
    # x_ref: (Cin, hw_tile)   activation tile, NCHW-native, lane-dense
    # w_ref: (Cout, Cin)      1x1 conv weight (pre-transposed in the wrapper)
    # b_ref: (Cout, 1)        conv bias, f32
    # o_ref: (Cout, hw_tile)  f32 output tile, lane-dense
    y = jnp.dot(w_ref[...], x_ref[...], preferred_element_type=jnp.float32)
    o_ref[...] = (y + b_ref[...]).astype(o_ref.dtype)


# ------------------------- wrapper -------------------------

@jax.jit
def bbox_head_forward(x_nchw, w, b):
    """BboxHead forward.

    x_nchw: (N, Cin, H, W)  activations (bf16 recommended upstream; f32 also works)
    w:      (Cin, Cout)     1x1 conv weight, Cout = num_anchors * 4
    b:      (Cout,)         conv bias
    returns (N, H * W * num_anchors, 4) float32
    """
    N, Cin, H, W = x_nchw.shape
    Cin_w, Cout = w.shape
    assert Cin_w == Cin and Cout % 4 == 0
    HW = H * W

    # Lane-dense HW tiling.  2048 columns => Cin=256 bf16 input block is ~1 MiB
    # per buffer (double-buffered), comfortably inside the 32 MiB scoped VMEM
    # default on v5e/v6e/v7x, while amortizing the ~0.35us per-grid-step cost.
    LANE, MAX_TILE = 128, 2048
    hw_tile = HW if HW <= MAX_TILE else MAX_TILE          # multiple of 128 when tiled
    # v7x: keep >= 2 parallel grid steps so both TensorCores get work at N=1.
    if N == 1 and pl.cdiv(HW, hw_tile) == 1 and HW >= 2 * LANE:
        hw_tile = max(LANE, ((HW // 2) // LANE) * LANE)
    grid_hw = pl.cdiv(HW, hw_tile)                         # tail block masked by Pallas

    # Free, layout-preserving view (row-major): NCHW -> (N, Cin, HW).
    x = x_nchw.reshape(N, Cin, HW)
    wt = jnp.transpose(w).astype(x.dtype)                  # (Cout, Cin) -- tiny
    b2 = b.reshape(Cout, 1).astype(jnp.float32)

    cost = pl.CostEstimate(
        flops=2 * N * HW * Cin * Cout,
        transcendentals=0,
        bytes_accessed=(x.size * x.dtype.itemsize
                        + wt.size * wt.dtype.itemsize
                        + b2.size * b2.dtype.itemsize
                        + N * Cout * HW * 4))

    out = pl.pallas_call(
        _bbox_head_kernel,
        out_shape=jax.ShapeDtypeStruct((N, Cout, HW), jnp.float32),
        grid=(N, grid_hw),
        in_specs=[
            pl.BlockSpec((pl.Squeezed(), Cin, hw_tile), lambda n, m: (n, 0, m)),
            pl.BlockSpec((Cout, Cin), lambda n, m: (0, 0)),
            pl.BlockSpec((Cout, 1), lambda n, m: (0, 0)),
        ],
        out_specs=pl.BlockSpec((pl.Squeezed(), Cout, hw_tile),
                               lambda n, m: (n, 0, m)),
        compiler_params=pltpu.CompilerParams(
            dimension_semantics=("parallel", "parallel")),
        cost_estimate=cost,
    )(x, wt, b2)

    # permute(0,2,3,1).contiguous().view(N, -1, 4): only the small Cout-channel
    # output is permuted here; the reshape to (N, HW*A, 4) is free (row-major).
    return jnp.transpose(out, (0, 2, 1)).reshape(N, HW * (Cout // 4), 4)


# ------------------------- pure-JAX reference -------------------------

def bbox_head_ref(x_nchw, w, b):
    # 1x1 conv (NCHW) == channel contraction; then permute to NHWC and view.
    y = jnp.einsum("nchw,cf->nhwf",
                   x_nchw.astype(jnp.float32), w.astype(jnp.float32),
                   precision=lax.Precision.HIGHEST)
    y = y + b.reshape(1, 1, 1, -1).astype(jnp.float32)
    return y.reshape(y.shape[0], -1, 4)


# ------------------------- main -------------------------

if __name__ == "__main__":
    key = jax.random.PRNGKey(0)
    N, Cin, H, W = 2, 4, 16, 16          # small shapes: batch=2, channels=4, 16x16
    num_anchors = 3                      # BboxHead default
    Cout = num_anchors * 4               # = 12

    kx, kw, kb = jax.random.split(key, 3)
    x = jax.random.normal(kx, (N, Cin, H, W), jnp.float32)
    w = jax.random.normal(kw, (Cin, Cout), jnp.float32) / (Cin ** 0.5)
    b = 0.1 * jax.random.normal(kb, (Cout,), jnp.float32)

    # Recommended deployment path: bf16 activations/weights arrive from
    # upstream; kernel accumulates in f32 and adds the f32 bias.
    x_bf = x.astype(jnp.bfloat16)
    w_bf = w.astype(jnp.bfloat16)

    out = jax.block_until_ready(bbox_head_forward(x_bf, w_bf, b))
    ref = jax.block_until_ready(bbox_head_ref(x_bf, w_bf, b))   # f32 math on bf16 inputs

    assert out.shape == (N, H * W * num_anchors, 4), out.shape
    err = float(jnp.max(jnp.abs(out.astype(jnp.float32) - ref)))
    if err > 1e-3:
        raise AssertionError(f"Pallas/BboxHead mismatch vs reference, max abs err = {err}")
    print("KERNEL_OK")
</pallas_src>

<mosaic_0001>
module attributes {stable_mosaic.version = 11 : i64} {
  func.func @_bbox_head_kernel(%arg0: i32, %arg1: i32, %arg2: memref<1x4x256xbf16, #tpu.memory_space<vmem>>, %arg3: memref<12x4xbf16, #tpu.memory_space<vmem>>, %arg4: memref<12x1xf32, #tpu.memory_space<vmem>>, %arg5: memref<1x12x256xf32, #tpu.memory_space<vmem>>) attributes {dimension_semantics = [#tpu.dimension_semantics<parallel>, #tpu.dimension_semantics<parallel>], iteration_bounds = array<i64: 2, 1>, scalar_prefetch = 0 : i64, scratch_operands = 0 : i64, tpu.core_type = #tpu.core_type<tc>, window_params = [{transform_indices = @transform_0, window_bounds = array<i64: 1, 4, 256>}, {pipeline_mode = #tpu.pipeline_mode<synchronous>, transform_indices = @transform_1, window_bounds = array<i64: 12, 4>}, {pipeline_mode = #tpu.pipeline_mode<synchronous>, transform_indices = @transform_2, window_bounds = array<i64: 12, 1>}, {transform_indices = @transform_3, window_bounds = array<i64: 1, 12, 256>}]} {
    %c0 = arith.constant 0 : index
    %c0_0 = arith.constant 0 : index
    %0 = vector.load %arg3[%c0, %c0_0] : memref<12x4xbf16, #tpu.memory_space<vmem>>, vector<12x4xbf16>
    %c0_1 = arith.constant 0 : index
    %c0_2 = arith.constant 0 : index
    %c0_3 = arith.constant 0 : index
    %1 = vector.load %arg2[%c0_1, %c0_2, %c0_3] : memref<1x4x256xbf16, #tpu.memory_space<vmem>>, vector<1x4x256xbf16>
    %2 = vector.shape_cast %1 : vector<1x4x256xbf16> to vector<4x256xbf16>
    %cst = arith.constant dense<0.000000e+00> : vector<12x256xf32>
    %3 = tpu.matmul %0, %2, %cst {dimension_numbers = #tpu.dot_dimension_numbers<[1], [0], [0], [1], [0, 0, 1, 1], [], []>} : vector<12x4xbf16>, vector<4x256xbf16>, vector<12x256xf32> -> vector<12x256xf32>
    %c0_4 = arith.constant 0 : index
    %c0_5 = arith.constant 0 : index
    %4 = vector.load %arg4[%c0_4, %c0_5] : memref<12x1xf32, #tpu.memory_space<vmem>>, vector<12x1xf32>
    %5 = vector.broadcast %4 : vector<12x1xf32> to vector<12x256xf32>
    %6 = arith.addf %3, %5 : vector<12x256xf32>
    %c0_6 = arith.constant 0 : index
    %c0_7 = arith.constant 0 : index
    %c0_8 = arith.constant 0 : index
    %7 = vector.load %arg5[%c0_6, %c0_7, %c0_8] : memref<1x12x256xf32, #tpu.memory_space<vmem>>, vector<1x12x256xf32>
    %8 = vector.shape_cast %7 : vector<1x12x256xf32> to vector<12x256xf32>
    %9 = vector.shape_cast %6 : vector<12x256xf32> to vector<1x12x256xf32>
    tpu.vector_store %arg5[%c0_6, %c0_7, %c0_8], %9 {strides = array<i32>} : memref<1x12x256xf32, #tpu.memory_space<vmem>>, vector<1x12x256xf32>,
    return
  }
  func.func @transform_0(%arg0: i32, %arg1: i32) -> (i32, i32, i32) {
    %c0_i32 = arith.constant 0 : i32
    %c0_i32_0 = arith.constant 0 : i32
    return %arg0, %c0_i32, %arg1 : i32, i32, i32
  }
  func.func @transform_1(%arg0: i32, %arg1: i32) -> (i32, i32) {
    %c0_i32 = arith.constant 0 : i32
    %c0_i32_0 = arith.constant 0 : i32
    %c0_i32_1 = arith.constant 0 : i32
    return %c0_i32, %c0_i32_0 : i32, i32
  }
  func.func @transform_2(%arg0: i32, %arg1: i32) -> (i32, i32) {
    %c0_i32 = arith.constant 0 : i32
    %c0_i32_0 = arith.constant 0 : i32
    %c0_i32_1 = arith.constant 0 : i32
    return %c0_i32, %c0_i32_0 : i32, i32
  }
  func.func @transform_3(%arg0: i32, %arg1: i32) -> (i32, i32, i32) {
    %c0_i32 = arith.constant 0 : i32
    %c0_i32_0 = arith.constant 0 : i32
    return %arg0, %c0_i32, %arg1 : i32, i32, i32
  }
}

</mosaic_0001>

<llo_original>
// kernel: bbox_head_forward.1
$region0: #{bbox_head_forward.1}
  #allocation0 [shape = 'u32[]', space=smem, size = 0x4, offset = 0x4, fixed_abs, tag = 'smem constant byte address 0x4 - core index']
  #allocation1 [shape = 'u32[72,128]{1,0:T(1,128)}', space=vmem, size = 0x9000, scoped, tag = 'internal scratch']
  %s0 = inlined_call_operand.vmem [shape: bf16[2,4,256], index: 0, kind: input, shape index: {}]
  %s1 = inlined_call_operand.vmem [shape: bf16[12,4], index: 1, kind: input, shape index: {}]
  %s2 = inlined_call_operand.vmem [shape: f32[12,1], index: 2, kind: input, shape index: {}]
  %s3 = inlined_call_operand.vmem [shape: f32[2,12,256], index: 3, kind: output, shape index: {}]
  %s4 = sld [smem:[#allocation0]]
  $region45: #{bbox_head_forward.1} parent=0
    _
  %s6 = ssub.s32 1, %s4
  %s7 = scalar_select 0, %s6, %s4
  loop: start=0, step=1, limit=4
  $region2: #{bbox_head_forward.1} parent=0 // loop_pre_header
    _
  $region3: #{bbox_head_forward.1} parent=0 // loop_header
    %s9 = sphi 0, %s13
    %p10 = scmp.ge.s32.totalorder %s9, 4
    %s16 = sphi 0, %s28
    %s17 = sphi 0, %s24
    %s18 = sphi 0, %s16
    %s19 = sphi 0, %s17
    %s20 = sphi 0, %s18
    %s21 = sphi 0, %s19
    %s33 = sphi 0, %s35
    %s36 = sphi 0, %s33
    %s37 = sphi 0, %s36
    %s53 = sphi 0, %s37
    %s57 = sphi 0, %s57
    %s59 = sphi 0, %s57
    %s60 = sphi 0, %s59
    %s74 = sphi 0, %s60
    %s78 = sphi 0, %s78
    %s80 = sphi 0, %s78
    %s81 = sphi 0, %s80
    %s95 = sphi 0, %s81
    %s103 = sphi 0, %s105
    %s106 = sphi 0, %s103
    %s107 = sphi 0, %s106
    %s123 = sphi 0, %s107
  $region4: #{bbox_head_forward.1} parent=0 // loop_header_branch
    %12 = sbr.rel (%p10) target = $region8
  $region5: #{bbox_head_forward.1} parent=0 // loop_body
    %s14 = ssub.s32 %s9, 1
    %s15 = ssub.s32 %s9, 2
    %s22 = sadd.s32 1, %s17
    %p23 = scmp.ge.s32.totalorder %s22, 1
    %s24 = scalar_select %p23, 0, %s22
    %s25 = sadd.s32 1, %s16
    %s26 = scalar_select %p23, %s25, %s16
    %p27 = scmp.ge.s32.totalorder %s26, 2
    %s28 = scalar_select %p27, 0, %s26
    %s29 = ssub.s32 %s16, %s28
    %s30 = ssub.s32 %s17, %s24
    %s31 = sor.u32 %s29, %s30
    %p32 = scmp.eq.s32.totalorder %s31, 0
    %s34 = sadd.s32 %s33, 1
    %s35 = scalar_select %p32, %s33, %s34
    %p38 = pneg %p32
    %p39 = scmp.eq.s32.totalorder %s9, 1
    %p40 = por %p38, %p39
    %p41 = scmp.ne.s32.totalorder %s33, %s36
    %p42 = scmp.eq.s32.totalorder %s9, 0
    %p43 = por %p41, %p42
    %p44 = scmp.ne.s32.totalorder %s33, %s36
    %p45 = scmp.eq.s32.totalorder %s14, 1
    %p46 = por %p44, %p45
    %p47 = scmp.ne.s32.totalorder %s36, %s37
    %p48 = scmp.eq.s32.totalorder %s14, 0
    %p49 = por %p47, %p48
    %p50 = scmp.ne.s32.totalorder %s36, %s37
    %p51 = scmp.eq.s32.totalorder %s15, 1
    %p52 = por %p50, %p51
    %p54 = scmp.ne.s32.totalorder %s37, %s53
    %p55 = scmp.eq.s32.totalorder %s15, 0
    %p56 = por %p54, %p55
    %s58 = sadd.s32 %s57, 1
    %p61 = scmp.eq.s32.totalorder %s9, 1
    %p62 = scmp.ne.s32.totalorder %s57, %s59
    %p63 = scmp.eq.s32.totalorder %s9, 0
    %p64 = por %p62, %p63
    %p65 = scmp.ne.s32.totalorder %s57, %s59
    %p66 = scmp.eq.s32.totalorder %s14, 1
    %p67 = por %p65, %p66
    %p68 = scmp.ne.s32.totalorder %s59, %s60
    %p69 = scmp.eq.s32.totalorder %s14, 0
    %p70 = por %p68, %p69
    %p71 = scmp.ne.s32.totalorder %s59, %s60
    %p72 = scmp.eq.s32.totalorder %s15, 1
    %p73 = por %p71, %p72
    %p75 = scmp.ne.s32.totalorder %s60, %s74
    %p76 = scmp.eq.s32.totalorder %s15, 0
    %p77 = por %p75, %p76
    %s79 = sadd.s32 %s78, 1
    %p82 = scmp.eq.s32.totalorder %s9, 1
    %p83 = scmp.ne.s32.totalorder %s78, %s80
    %p84 = scmp.eq.s32.totalorder %s9, 0
    %p85 = por %p83, %p84
    %p86 = scmp.ne.s32.totalorder %s78, %s80
    %p87 = scmp.eq.s32.totalorder %s14, 1
    %p88 = por %p86, %p87
    %p89 = scmp.ne.s32.totalorder %s80, %s81
    %p90 = scmp.eq.s32.totalorder %s14, 0
    %p91 = por %p89, %p90
    %p92 = scmp.ne.s32.totalorder %s80, %s81
    %p93 = scmp.eq.s32.totalorder %s15, 1
    %p94 = por %p92, %p93
    %p96 = scmp.ne.s32.totalorder %s81, %s95
    %p97 = scmp.eq.s32.totalorder %s15, 0
    %p98 = por %p96, %p97
    %s99 = ssub.s32 %s16, %s28
    %s100 = ssub.s32 %s17, %s24
    %s101 = sor.u32 %s99, %s100
    %p102 = scmp.eq.s32.totalorder %s101, 0
    %s104 = sadd.s32 %s103, 1
    %s105 = scalar_select %p102, %s103, %s104
    %p108 = pneg %p102
    %p109 = scmp.eq.s32.totalorder %s9, 1
    %p110 = por %p108, %p109
    %p111 = scmp.ne.s32.totalorder %s103, %s106
    %p112 = scmp.eq.s32.totalorder %s9, 0
    %p113 = por %p111, %p112
    %p114 = scmp.ne.s32.totalorder %s103, %s106
    %p115 = scmp.eq.s32.totalorder %s14, 1
    %p116 = por %p114, %p115
    %p117 = scmp.ne.s32.totalorder %s106, %s107
    %p118 = scmp.eq.s32.totalorder %s14, 0
    %p119 = por %p117, %p118
    %p120 = scmp.ne.s32.totalorder %s106, %s107
    %p121 = scmp.eq.s32.totalorder %s15, 1
    %p122 = por %p120, %p121
    %p124 = scmp.ne.s32.totalorder %s107, %s123
    %p125 = scmp.eq.s32.totalorder %s15, 0
    %p126 = por %p124, %p125
    %p127 = scmp.le.s32.totalorder 1, %s9
    %p128 = scmp.lt.s32.totalorder %s9, 3
    %p129 = pnand %p127, %p128
    %p130 = pneg %p129
    // Predicated region
    $region9: #{bbox_head_forward.1} parent=5 // pred_check
      _
    $region10: #{bbox_head_forward.1} parent=5 // pred_check_branch
      %132 = sbr.rel (%p129) target = $region12
    $region11: #{bbox_head_forward.1} parent=5 // pred_region
      %s133 = ssub.s32 %s9, 1
      // Predicated region
      $region13: #{bbox_head_forward.1} parent=11 // pred_check
        %p134 = pneg %p70
      $region14: #{bbox_head_forward.1} parent=11 // pred_check_branch
        %136 = sbr.rel (%p134) target = $region16
      $region15: #{bbox_head_forward.1} parent=11 // pred_region
        _
      $region16: #{bbox_head_forward.1} parent=11 // pred_fallthru
        _
      // Predicated region
      $region17: #{bbox_head_forward.1} parent=11 // pred_check
        %p137 = pneg %p91
      $region18: #{bbox_head_forward.1} parent=11 // pred_check_branch
        %139 = sbr.rel (%p137) target = $region20
      $region19: #{bbox_head_forward.1} parent=11 // pred_region
        _
      $region20: #{bbox_head_forward.1} parent=11 // pred_fallthru
        _
    $region12: #{bbox_head_forward.1} parent=5 // pred_fallthru
      _
    %p140 = scmp.lt.s32.totalorder %s9, 2
    // Predicated region
    $region21: #{bbox_head_forward.1} parent=5 // pred_check
      %p141 = pneg %p140
    $region22: #{bbox_head_forward.1} parent=5 // pred_check_branch
      %143 = sbr.rel (%p141) target = $region24
    $region23: #{bbox_head_forward.1} parent=5 // pred_region
      // Predicated region
      $region25: #{bbox_head_forward.1} parent=23 // pred_check
        %p144 = pneg %p43
      $region26: #{bbox_head_forward.1} parent=23 // pred_check_branch
        %146 = sbr.rel (%p144) target = $region28
      $region27: #{bbox_head_forward.1} parent=23 // pred_region
        %s147 = smul.u32 2, %s17
        %p148 = scmp.lt.s32.totalorder %s16, 1
        %s149 = scalar_select %p148, %s16, 1
        %p150 = scmp.lt.s32.totalorder %s147, 1
        %s151 = scalar_select %p150, %s147, 1
        %s152 = smul.addr %s149, 2
        %s153 = sadd.s32 %s151, %s152
        %s154 = smul.addr %s153, 2
        %s155 = scalar_lea.vmem %s0, %s154
        %s156 = smul.u32 2, %s17
      $region28: #{bbox_head_forward.1} parent=23 // pred_fallthru
        _
    $region24: #{bbox_head_forward.1} parent=5 // pred_fallthru
      _
    %p157 = scmp.le.s32.totalorder 1, %s9
    %p158 = scmp.lt.s32.totalorder %s9, 3
    %p159 = pnand %p157, %p158
    %p160 = pneg %p159
    // Predicated region
    $region29: #{bbox_head_forward.1} parent=5 // pred_check
      _
    $region30: #{bbox_head_forward.1} parent=5 // pred_check_branch
      %162 = sbr.rel (%p159) target = $region32
    $region31: #{bbox_head_forward.1} parent=5 // pred_region
      %s163 = ssub.s32 %s9, 1
      %s164 = smul.u32 2, %s19
      %p165 = scmp.lt.s32.totalorder %s18, 1
      %s166 = scalar_select %p165, %s18, 1
      %p167 = scmp.lt.s32.totalorder %s164, 1
      %s168 = scalar_select %p167, %s164, 1
      %s169 = smul.addr %s166, 2
      %s170 = sadd.s32 %s168, %s169
      %s171 = smul.addr %s170, 2
      %s172 = scalar_lea.vmem %s0, %s171
      %p173 = pneg %p49
      %p174 = pneg %p46
      %p175 = pneg %p70
      %p176 = pneg %p67
      %p177 = pneg %p91
      %p178 = pneg %p88
      %p179 = pneg %p119
      %p180 = pneg %p116
      %s181 = smul.u32 2, %s19
      %p182 = scmp.lt.s32.totalorder %s18, 1
      %s183 = scalar_select %p182, %s18, 1
      %p184 = scmp.lt.s32.totalorder %s181, 1
      %s185 = scalar_select %p184, %s181, 1
      %s186 = smul.addr %s183, 4
      %s187 = sadd.s32 %s185, %s186
      %s188 = smul.addr %s187, 8
      %s189 = scalar_lea.vmem %s3, %s188
      %s190 = smul.u32 2, %s19
      %p191 = scmp.lt.s32.totalorder %s18, 1
      %s192 = scalar_select %p191, %s18, 1
      %p193 = scmp.lt.s32.totalorder %s190, 1
      %s194 = scalar_select %p193, %s190, 1
      %s195 = smul.addr %s192, 2
      %s196 = sadd.s32 %s194, %s195
      %s197 = smul.addr %s196, 2
      %s198 = scalar_lea.vmem %s0, %s197
      %s199 = smul.u32 2, %s19
      %s200 = smul.u32 2, %s19
      %p201 = scmp.lt.s32.totalorder %s18, 1
      %s202 = scalar_select %p201, %s18, 1
      %p203 = scmp.lt.s32.totalorder %s200, 1
      %s204 = scalar_select %p203, %s200, 1
      %s205 = smul.addr %s202, 4
      %s206 = sadd.s32 %s204, %s205
      %s207 = smul.addr %s206, 8
      %s208 = scalar_lea.vmem %s3, %s207
      %s209 = smul.u32 2, %s19
      %v211 = vld [vmem:[%s1] sm:$0xf]
      %v212 = vld [vmem:[%s1 + $0x4] sm:$0x3]
      %v213 = vld [vmem:[%s198] sm:$0xf]
      %v214 = vld [vmem:[%s2] sm:$0xff]
      %v215 = vld [vmem:[%s2 + $0x8] sm:$0xf]
      %217 = vset.pattern.permute.xlu0 0
      %218 = vperm.xlu0 %217, %v214
      %v219 = vpop.permute.xlu0 %218
      %222 = vset.pattern.permute.xlu0 0
      %223 = vperm.xlu0 %222, %v215
      %v224 = vpop.permute.xlu0 %223
      %v228 = vunpack.c.l.b16 %v211
      %v229 = vunpack.c.l.b16 %v212
      %v230 = vpack.c.b16 %v229, %v228
      %232 = vst [vmem:[#allocation1] ss:$4 sm:$0xff] %v213
      %v233 = vld.sshfl [vmem:[#allocation1] sm:$0xff pattern:$0x73625140]
      %v234 = vld.sshfl [vmem:[#allocation1 + $0x8] sm:$0xff pattern:$0x73625140]
      %vm235 = vcmask 31744
      %v237 = vsel %vm235, %v230, 0
      %vm239 = vcmask 1041408
      %v240 = vsel %vm239, %v233, 0
      %v242 = vsel %vm239, %v234, 0
      %244 = vmatpush.bf16.msra.mxu0 0
      %245 = vmatpush.bf16.msra.mxu0 0
      %246 = vmatpush.bf16.msra.mxu0 0
      %247 = vmatpush.bf16.msra.mxu0 0
      %248 = vmatpush.bf16.msra.mxu0 0
      %249 = vmatpush.bf16.msra.mxu0 0
      %250 = vmatpush.bf16.msra.mxu0 0
      %251 = vmatpush.bf16.msra.mxu0 %v240
      %252 = vmatmul.bf16.gmra.mxu0 %v237
      %v253 = vpop.f32.mrf.mxu0
      %v254 = vadd.f32 %v219, %v253
      %v255 = vpop.f32.mrf.mxu0
      %v256 = vadd.f32 %v224, %v255
      %257 = vdwg.mxu0
      %258 = vmatpush.bf16.msra.mxu0 0
      %259 = vmatpush.bf16.msra.mxu0 0
      %260 = vmatpush.bf16.msra.mxu0 0
      %261 = vmatpush.bf16.msra.mxu0 0
      %262 = vmatpush.bf16.msra.mxu0 0
      %263 = vmatpush.bf16.msra.mxu0 0
      %264 = vmatpush.bf16.msra.mxu0 0
      %265 = vmatpush.bf16.msra.mxu0 %v242
      %266 = vmatmul.bf16.gmra.mxu0 %v237
      %v267 = vpop.f32.mrf.mxu0
      %v268 = vadd.f32 %v219, %v267
      %v269 = vpop.f32.mrf.mxu0
      %v270 = vadd.f32 %v224, %v269
      %271 = vdwg.mxu0
      %272 = vst [vmem:[%s208] sm:$0xff] %v254
      %273 = vst [vmem:[%s208 + $0x8] sm:$0xff] %v268
      %274 = vst [vmem:[%s208 + $0x10] sm:$0xf] %v256
      %275 = vst [vmem:[%s208 + $0x18] sm:$0xf] %v270
      %s276 = smul.u32 2, %s19
      %p277 = scmp.lt.s32.totalorder %s18, 1
      %s278 = scalar_select %p277, %s18, 1
      %p279 = scmp.lt.s32.totalorder %s276, 1
      %s280 = scalar_select %p279, %s276, 1
      %s281 = smul.addr %s278, 4
      %s282 = sadd.s32 %s280, %s281
      %s283 = smul.addr %s282, 8
      %s284 = scalar_lea.vmem %s3, %s283
      // Predicated region
      $region33: #{bbox_head_forward.1} parent=31 // pred_check
        %p285 = pneg %p116
      $region34: #{bbox_head_forward.1} parent=31 // pred_check_branch
        %287 = sbr.rel (%p285) target = $region36
      $region35: #{bbox_head_forward.1} parent=31 // pred_region
        %s288 = smul.u32 2, %s19
      $region36: #{bbox_head_forward.1} parent=31 // pred_fallthru
        _
    $region32: #{bbox_head_forward.1} parent=5 // pred_fallthru
      _
    %p289 = scmp.le.s32.totalorder 2, %s9
    // Predicated region
    $region37: #{bbox_head_forward.1} parent=5 // pred_check
      %p290 = pneg %p289
    $region38: #{bbox_head_forward.1} parent=5 // pred_check_branch
      %292 = sbr.rel (%p290) target = $region40
    $region39: #{bbox_head_forward.1} parent=5 // pred_region
      %s293 = ssub.s32 %s9, 2
      // Predicated region
      $region41: #{bbox_head_forward.1} parent=39 // pred_check
        %p294 = pneg %p122
      $region42: #{bbox_head_forward.1} parent=39 // pred_check_branch
        %296 = sbr.rel (%p294) target = $region44
      $region43: #{bbox_head_forward.1} parent=39 // pred_region
        %s297 = smul.u32 2, %s21
        %p298 = scmp.lt.s32.totalorder %s20, 1
        %s299 = scalar_select %p298, %s20, 1
        %p300 = scmp.lt.s32.totalorder %s297, 1
        %s301 = scalar_select %p300, %s297, 1
        %s302 = smul.addr %s299, 4
        %s303 = sadd.s32 %s301, %s302
        %s304 = smul.addr %s303, 8
        %s305 = scalar_lea.vmem %s3, %s304
      $region44: #{bbox_head_forward.1} parent=39 // pred_fallthru
        _
    $region40: #{bbox_head_forward.1} parent=5 // pred_fallthru
      _
  $region6: #{bbox_head_forward.1} parent=0 // loop_footer
    %s13 = sadd.s32 1, %s9
  $region7: #{bbox_head_forward.1} parent=0 // loop_footer_branch
    %8 = sbr.rel target = $region3
  $region8: #{bbox_head_forward.1} parent=0 // loop_exit
    _

</llo_original>
